<compile_context>
chip_gen: v6e
topology: v6e:2x2x1
jax: 0.10.0
libtpu: 0.0.40
codegen_flags: <defaults>
</compile_context>

<pallas_src>
import jax
import jax.numpy as jnp
from jax.experimental import pallas as pl
from jax.experimental.pallas import tpu as pltpu

_LANES = 128
_BASE_SUBLANES = 8
# ~4 MiB per-array block: 3 arrays x 2 pipeline buffers = 24 MiB total,
# comfortably inside v7x's 64 MiB VMEM and v5e/v6e's 128 MiB.
_TARGET_BLOCK_BYTES = 4 << 20
_VMEM_LIMIT_BYTES = 48 << 20              # <= ~48 MiB keeps v7x headroom
# Lane widths to try, widest first (lane-dense output => unmasked vst).
_COL_CANDIDATES = (8192, 4096, 2048, 1024, 512, 256, 128)


def _mul_kernel(x1_ref, x2_ref, o_ref):
    o_ref[...] = x1_ref[...] * x2_ref[...]


def _sublane_multiple(itemsize: int) -> int:
    # Native TPU second-minor tiling: 8 (f32), 16 (bf16/f16), 32 (int8/fp8).
    return max(_BASE_SUBLANES, _BASE_SUBLANES * (4 // max(1, itemsize)))


def _choose_layout(n: int, itemsize: int):
    """Pick (rows, cols, blk_rows) for a lane-dense 2-D slab of n elements."""
    sub = _sublane_multiple(itemsize)
    cols = None
    for c in _COL_CANDIDATES:
        if n % c == 0 and (n // c) % sub == 0:
            cols = c
            break
    if cols is None:
        return None                        # caller falls back to XLA
    rows = n // cols                       # multiple of `sub` by construction

    blk_rows = _TARGET_BLOCK_BYTES // (cols * itemsize)
    blk_rows = max(sub, (blk_rows // sub) * sub)
    blk_rows = min(blk_rows, rows)
    # v7x has 2 TensorCores: a "parallel" grid with >=2 balanced blocks lets
    # both take half the work.  Neutral on v5e/v6e (single TC).
    if blk_rows == rows and rows >= 2 * sub:
        half = rows // 2
        blk_rows = ((half + sub - 1) // sub) * sub
    return rows, cols, blk_rows


def pallas_multiply(x1: jax.Array, x2: jax.Array) -> jax.Array:
    # torch.mul broadcasts; the NAS module always feeds equal shapes, but keep
    # a safe fallback for broadcasting / mixed dtypes instead of asserting.
    if x1.shape != x2.shape or x1.dtype != x2.dtype:
        return jnp.multiply(x1, x2)

    orig_shape = x1.shape
    n = x1.size
    itemsize = jnp.dtype(x1.dtype).itemsize
    sub = _sublane_multiple(itemsize)
    tile_elems = sub * _LANES

    # Ragged or tiny sizes: let XLA fuse the multiply directly — a pad/slice
    # round trip would double HBM traffic for a purely memory-bound op.
    # Threshold kept at one vreg tile so the small demo below still exercises
    # the Pallas path; raise (e.g. to 64K elements) for production use.
    if n < tile_elems or n % tile_elems != 0:
        return jnp.multiply(x1, x2)

    layout = _choose_layout(n, itemsize)
    if layout is None:
        return jnp.multiply(x1, x2)
    rows, cols, blk_rows = layout

    # Contiguous reshapes: no data movement.
    x1_2d = x1.reshape(rows, cols)
    x2_2d = x2.reshape(rows, cols)

    grid = (pl.cdiv(rows, blk_rows),)
    spec = pl.BlockSpec((blk_rows, cols), lambda i: (i, 0))

    out_2d = pl.pallas_call(
        _mul_kernel,
        out_shape=jax.ShapeDtypeStruct((rows, cols), x1.dtype),
        grid_spec=pltpu.PrefetchScalarGridSpec(
            num_scalar_prefetch=0,
            grid=grid,
            in_specs=[spec, spec],
            out_specs=spec,
        ),
        compiler_params=pltpu.CompilerParams(
            dimension_semantics=("parallel",),
            vmem_limit_bytes=_VMEM_LIMIT_BYTES,
        ),
    )(x1_2d, x2_2d)

    return out_2d.reshape(orig_shape)


def multiply_forward(x1, x2):
    """Mirrors Mulitply.forward: returns (res, lat, mem)."""
    res = pallas_multiply(x1, x2)
    # TODO(synk): lookup_torch('multiply', ...) latency/memory profiling table
    # has no Pallas equivalent; returning 0.0 placeholders.
    lat = jnp.float32(0.0)
    mem = jnp.float32(0.0)
    return res, lat, mem


if __name__ == "__main__":
    key = jax.random.PRNGKey(0)
    k1, k2, k3, k4 = jax.random.split(key, 4)

    # Small NCHW shape consistent with the module (aligned -> Pallas path).
    x1 = jax.random.normal(k1, (2, 4, 16, 16), dtype=jnp.float32)
    x2 = jax.random.normal(k2, (2, 4, 16, 16), dtype=jnp.float32)
    res, lat, mem = multiply_forward(x1, x2)
    res = jax.block_until_ready(res)
    assert res.shape == x1.shape
    assert jnp.allclose(res, x1 * x2, atol=1e-6, rtol=1e-6)

    # Moderately larger aligned shape (wide-lane layout path, multi-block grid).
    y1 = jax.random.normal(k3, (2, 8, 64, 64), dtype=jnp.float32)
    y2 = jax.random.normal(k4, (2, 8, 64, 64), dtype=jnp.float32)
    resy = jax.block_until_ready(pallas_multiply(y1, y2))
    assert jnp.allclose(resy, y1 * y2, atol=1e-6, rtol=1e-6)

    # bf16 aligned shape exercises dtype-aware sublane alignment.
    b1 = jax.random.normal(k3, (2, 8, 32, 128), dtype=jnp.bfloat16)
    b2 = jax.random.normal(k4, (2, 8, 32, 128), dtype=jnp.bfloat16)
    resb = jax.block_until_ready(pallas_multiply(b1, b2))
    assert jnp.allclose(resb.astype(jnp.float32),
                        (b1.astype(jnp.float32) * b2.astype(jnp.float32)),
                        atol=1e-2, rtol=1e-2)

    # Ragged shape exercises the XLA fallback branch.
    z1 = jax.random.normal(k1, (2, 3, 5, 7), dtype=jnp.float32)
    z2 = jax.random.normal(k2, (2, 3, 5, 7), dtype=jnp.float32)
    resz = jax.block_until_ready(pallas_multiply(z1, z2))
    assert jnp.allclose(resz, z1 * z2, atol=1e-6, rtol=1e-6)

    print("KERNEL_OK")
</pallas_src>

<mosaic_0001>
module attributes {stable_mosaic.version = 11 : i64} {
  func.func @_mul_kernel(%arg0: i32, %arg1: memref<8x256xf32, #tpu.memory_space<vmem>>, %arg2: memref<8x256xf32, #tpu.memory_space<vmem>>, %arg3: memref<8x256xf32, #tpu.memory_space<vmem>>) attributes {dimension_semantics = [#tpu.dimension_semantics<parallel>], iteration_bounds = array<i64: 1>, scalar_prefetch = 0 : i64, scratch_operands = 0 : i64, tpu.core_type = #tpu.core_type<tc>, window_params = [{transform_indices = @transform_0, window_bounds = array<i64: 8, 256>}, {transform_indices = @transform_1, window_bounds = array<i64: 8, 256>}, {transform_indices = @transform_2, window_bounds = array<i64: 8, 256>}]} {
    %c0 = arith.constant 0 : index
    %c0_0 = arith.constant 0 : index
    %0 = vector.load %arg1[%c0, %c0_0] : memref<8x256xf32, #tpu.memory_space<vmem>>, vector<8x256xf32>
    %c0_1 = arith.constant 0 : index
    %c0_2 = arith.constant 0 : index
    %1 = vector.load %arg2[%c0_1, %c0_2] : memref<8x256xf32, #tpu.memory_space<vmem>>, vector<8x256xf32>
    %2 = arith.mulf %0, %1 : vector<8x256xf32>
    %c0_3 = arith.constant 0 : index
    %c0_4 = arith.constant 0 : index
    %3 = vector.load %arg3[%c0_3, %c0_4] : memref<8x256xf32, #tpu.memory_space<vmem>>, vector<8x256xf32>
    tpu.vector_store %arg3[%c0_3, %c0_4], %2 {strides = array<i32>} : memref<8x256xf32, #tpu.memory_space<vmem>>, vector<8x256xf32>,
    return
  }
  func.func @transform_0(%arg0: i32) -> (i32, i32) {
    %c0_i32 = arith.constant 0 : i32
    %c0_i32_0 = arith.constant 0 : i32
    return %arg0, %c0_i32 : i32, i32
  }
  func.func @transform_1(%arg0: i32) -> (i32, i32) {
    %c0_i32 = arith.constant 0 : i32
    %c0_i32_0 = arith.constant 0 : i32
    return %arg0, %c0_i32 : i32, i32
  }
  func.func @transform_2(%arg0: i32) -> (i32, i32) {
    %c0_i32 = arith.constant 0 : i32
    %c0_i32_0 = arith.constant 0 : i32
    return %arg0, %c0_i32 : i32, i32
  }
}

</mosaic_0001>

<llo_original>
// kernel: tpu_custom_call.1
$region0: #{tpu_custom_call.1}
  #allocation0 [shape = 'u32[]', space=smem, size = 0x4, offset = 0x4, fixed_abs, tag = 'smem constant byte address 0x4 - core index']
  #allocation1 [shape = 'u32[144,128]{1,0:T(1,128)}', space=vmem, size = 0x12000, scoped, tag = 'internal scratch']
  %s0 = inlined_call_operand.hbm [shape: f32[8,256], index: 0, kind: input, shape index: {}]
  %s1 = inlined_call_operand.hbm [shape: f32[8,256], index: 1, kind: input, shape index: {}]
  %s2 = inlined_call_operand.hbm [shape: f32[8,256], index: 2, kind: output, shape index: {}]
  %s3 = sld [smem:[#allocation0]]
  $region26: #{tpu_custom_call.1} parent=0
    _
  %s5 = ssub.s32 1, %s3
  %s6 = scalar_select 0, %s5, %s3
  $region1: #{tpu_custom_call.1} parent=0
    #allocation2 [shape = 'u8[8192]{0}', space=vmem, size = 0x2000, scoped, tag = 'input window, operand 0, single buffered']
    #allocation3 [shape = 's32[1]{0}', space=sflag, size = 0x4, scoped, tag = 'scoped memory for tpu_custom_call.1']
    #allocation4 [shape = 's32[1]{0}', space=sflag, size = 0x4, scoped, tag = 'scoped memory for tpu_custom_call.1']
    #allocation5 [shape = 'u8[8192]{0}', space=vmem, size = 0x2000, scoped, tag = 'input window, operand 1, single buffered']
    #allocation6 [shape = 's32[1]{0}', space=sflag, size = 0x4, scoped, tag = 'scoped memory for tpu_custom_call.1']
    #allocation7 [shape = 'u8[8192]{0}', space=vmem, size = 0x2000, scoped, tag = 'output window, operand 0, single buffered']
    %7 = vsyncpa [#allocation3], 0
    %8 = vsyncpa [#allocation6], 0
    %9 = vsyncpa [#allocation4], 0
    // Predicated region
    $region2: #{tpu_custom_call.1} parent=1 // pred_check
      _
    $region3: #{tpu_custom_call.1} parent=1 // pred_check_branch
      %11 = sbr.rel (0) target = $region5
    $region4: #{tpu_custom_call.1} parent=1 // pred_region
      %s13 = ssub.s32 256, 256
      %14 = vsyncadd [#allocation3], %s13
      %s16 = sshll.u32 [#allocation2], 4
      %s17 = int_to_ptr.vmem [resolvable:$true] %s16
      %19 = dma.hbm_to_vmem [thread:$0]  %s0, 256, %s17, [#allocation3]
    $region5: #{tpu_custom_call.1} parent=1 // pred_fallthru
      _
    // Predicated region
    $region6: #{tpu_custom_call.1} parent=1 // pred_check
      _
    $region7: #{tpu_custom_call.1} parent=1 // pred_check_branch
      %21 = sbr.rel (0) target = $region9
    $region8: #{tpu_custom_call.1} parent=1 // pred_region
      %s23 = ssub.s32 256, 256
      %24 = vsyncadd [#allocation6], %s23
      %s26 = sshll.u32 [#allocation5], 4
      %s27 = int_to_ptr.vmem [resolvable:$true] %s26
      %29 = dma.hbm_to_vmem [thread:$0]  %s1, 256, %s27, [#allocation6]
    $region9: #{tpu_custom_call.1} parent=1 // pred_fallthru
      _
    // Predicated region
    $region10: #{tpu_custom_call.1} parent=1 // pred_check
      _
    $region11: #{tpu_custom_call.1} parent=1 // pred_check_branch
      %31 = sbr.rel (0) target = $region13
    $region12: #{tpu_custom_call.1} parent=1 // pred_region
      %32 = dma.done [#allocation3], 256
    $region13: #{tpu_custom_call.1} parent=1 // pred_fallthru
      _
    // Predicated region
    $region14: #{tpu_custom_call.1} parent=1 // pred_check
      _
    $region15: #{tpu_custom_call.1} parent=1 // pred_check_branch
      %34 = sbr.rel (0) target = $region17
    $region16: #{tpu_custom_call.1} parent=1 // pred_region
      %35 = dma.done [#allocation6], 256
    $region17: #{tpu_custom_call.1} parent=1 // pred_fallthru
      _
    %v36 = vld [vmem:[#allocation2] sm:$0xff]
    %v37 = vld [vmem:[#allocation2 + $0x8] sm:$0xff]
    %v38 = vld [vmem:[#allocation5] sm:$0xff]
    %v39 = vld [vmem:[#allocation5 + $0x8] sm:$0xff]
    %v40 = vmul.f32 %v36, %v38
    %v41 = vmul.f32 %v37, %v39
    %42 = vst [vmem:[#allocation7] sm:$0xff] %v40
    %43 = vst [vmem:[#allocation7 + $0x8] sm:$0xff] %v41
    // Predicated region
    $region18: #{tpu_custom_call.1} parent=1 // pred_check
      _
    $region19: #{tpu_custom_call.1} parent=1 // pred_check_branch
      %45 = sbr.rel (0) target = $region21
    $region20: #{tpu_custom_call.1} parent=1 // pred_region
      %s47 = ssub.s32 256, 256
      %48 = vsyncadd [#allocation4], %s47
      %s50 = sshll.u32 [#allocation7], 4
      %s51 = int_to_ptr.vmem [resolvable:$true] %s50
      %53 = dma.vmem_to_hbm [thread:$0]  %s51, 256, %s2, [#allocation4]
    $region21: #{tpu_custom_call.1} parent=1 // pred_fallthru
      _
    // Predicated region
    $region22: #{tpu_custom_call.1} parent=1 // pred_check
      _
    $region23: #{tpu_custom_call.1} parent=1 // pred_check_branch
      %55 = sbr.rel (0) target = $region25
    $region24: #{tpu_custom_call.1} parent=1 // pred_region
      %56 = dma.done [#allocation4], 256
    $region25: #{tpu_custom_call.1} parent=1 // pred_fallthru
      _
    %57 = vsyncpa [#allocation3], 1
    %58 = vsyncpa [#allocation6], 1
    %59 = vsyncpa [#allocation4], 1

</llo_original>
